<compile_context>
chip_gen: v5e
topology: v5e:2x2
jax: 0.10.0
libtpu: 0.0.40
codegen_flags: <defaults>
</compile_context>

<pallas_src>
import functools

import jax
import jax.numpy as jnp
from jax.experimental import pallas as pl
from jax.experimental.pallas import tpu as pltpu


# ----------------------------------------------------------------------------
# Kernel
# ----------------------------------------------------------------------------
def sdpa_kernel(q_ref, k_ref, v_ref, out_ref, attn_ref, *, scale, mxu_dtype):
    compute_dtype = mxu_dtype if mxu_dtype is not None else q_ref.dtype

    # Fold the 1/temperature scale into q (small tile) before the matmul.
    q = (q_ref[...].astype(jnp.float32) * scale).astype(compute_dtype)
    k = k_ref[...].astype(compute_dtype)

    # scores: contract last dim of q with last dim of k (no transpose copy).
    s = jax.lax.dot_general(
        q, k,
        dimension_numbers=(((2,), (2,)), ((0,), (0,))),
        preferred_element_type=jnp.float32,
    )                                               # (Bb, Lqb, Lk), f32

    # Numerically-stable softmax along the key axis (dim=2), all in f32.
    s = s - jnp.max(s, axis=-1, keepdims=True)
    e = jnp.exp(s)
    denom = jnp.sum(e, axis=-1, keepdims=True)      # (Bb, Lqb, 1)
    a = e * (1.0 / denom)                           # exact reciprocal

    attn_ref[...] = a.astype(attn_ref.dtype)

    p = a.astype(compute_dtype)
    v = v_ref[...].astype(compute_dtype)
    o = jax.lax.dot_general(
        p, v,
        dimension_numbers=(((2,), (1,)), ((0,), (0,))),
        preferred_element_type=jnp.float32,
    )                                               # (Bb, Lqb, Dv)
    out_ref[...] = o.astype(out_ref.dtype)


# ----------------------------------------------------------------------------
# Generation-aware VMEM budgeting & tile selection
# ----------------------------------------------------------------------------
def _vmem_budget():
    """Returns (tile_budget_bytes, vmem_limit_bytes, num_tensorcores)."""
    try:
        vmem_cap = int(pltpu.get_tpu_info().vmem_capacity_bytes)
    except Exception:
        vmem_cap = 64 << 20            # conservative default (v7x per-TC VMEM)
    if vmem_cap >= (100 << 20):        # v5e / v6e: 128 MiB VMEM, single TC
        return 20 << 20, 64 << 20, 1
    return 10 << 20, 40 << 20, 2       # v7x: 64 MiB per TC, 2 TCs/chip


def _choose_tiles(B, Lq, Lk, Dk, Dv, *, in_bytes, out_bytes, attn_bytes,
                  mxu_bytes, tile_budget_bytes, num_cores):
    """Pick (block_b, block_lq) maximizing work/step under the VMEM budget."""
    # block_lq must be a multiple of 8 (sublane) or the full Lq extent.
    lq_cands = sorted(
        {d for d in range(1, Lq + 1) if Lq % d == 0 and (d == Lq or d % 8 == 0)},
        reverse=True)
    b_cands = [d for d in range(B, 0, -1) if B % d == 0]

    def step_bytes(bb, blq):
        # double-buffered pipelined input/output tiles
        pipelined = 2 * bb * (
            blq * Dk * in_bytes + Lk * Dk * in_bytes + Lk * Dv * in_bytes
            + blq * Dv * out_bytes + blq * Lk * attn_bytes)
        # f32 softmax intermediates (s, e, a) + f32 output accumulator
        scratch = bb * (3 * blq * Lk * 4 + blq * Dv * 4)
        if mxu_bytes is not None:
            scratch += bb * (blq * Dk + Lk * Dk + Lk * Dv + blq * Lk) * mxu_bytes
        return pipelined + scratch

    feasible = [(bb, blq) for bb in b_cands for blq in lq_cands
                if step_bytes(bb, blq) <= tile_budget_bytes]
    if not feasible:
        # TODO(synk): flash-style Lk tiling fallback for very long key lengths.
        return 1, lq_cands[-1]

    def work(c):
        return c[0] * c[1]

    best = max(feasible, key=work)
    if num_cores > 1:
        # Prefer an even number of grid steps so both TensorCores stay busy,
        # unless the balanced choice costs more than 2x work per step.
        def steps(c):
            return (B // c[0]) * (Lq // c[1])
        balanced = [c for c in feasible if steps(c) % num_cores == 0]
        if balanced:
            best_bal = max(balanced, key=work)
            if work(best_bal) * 2 >= work(best):
                best = best_bal
    return best


# ----------------------------------------------------------------------------
# Wrapper
# ----------------------------------------------------------------------------
def scaled_dot_product_attention(q, k, v, temperature, *,
                                 block_b=None, block_lq=None, mxu_dtype=None):
    B, Lq, Dk = q.shape
    Bk, Lk, Dk2 = k.shape
    Bv, Lv, Dv = v.shape
    assert B == Bk == Bv and Dk == Dk2 and Lk == Lv

    tile_budget, vmem_limit, num_cores = _vmem_budget()
    out_dtype = q.dtype
    attn_dtype = q.dtype                   # matches torch: attn inherits q's dtype
    in_bytes = jnp.dtype(q.dtype).itemsize
    mxu_bytes = jnp.dtype(mxu_dtype).itemsize if mxu_dtype is not None else None

    if block_b is None or block_lq is None:
        bb, blq = _choose_tiles(
            B, Lq, Lk, Dk, Dv,
            in_bytes=in_bytes,
            out_bytes=jnp.dtype(out_dtype).itemsize,
            attn_bytes=jnp.dtype(attn_dtype).itemsize,
            mxu_bytes=mxu_bytes,
            tile_budget_bytes=tile_budget,
            num_cores=num_cores)
        block_b = block_b if block_b is not None else bb
        block_lq = block_lq if block_lq is not None else blq
    assert B % block_b == 0, "block_b must divide the batch dimension"
    assert Lq % block_lq == 0, "block_lq must divide the query length"
    grid = (B // block_b, Lq // block_lq)

    kernel = functools.partial(
        sdpa_kernel, scale=float(1.0 / temperature), mxu_dtype=mxu_dtype)

    out, attn = pl.pallas_call(
        kernel,
        out_shape=(
            jax.ShapeDtypeStruct((B, Lq, Dv), out_dtype),
            jax.ShapeDtypeStruct((B, Lq, Lk), attn_dtype),
        ),
        grid_spec=pltpu.PrefetchScalarGridSpec(
            num_scalar_prefetch=0,
            grid=grid,
            in_specs=[
                pl.BlockSpec((block_b, block_lq, Dk), lambda b, l: (b, l, 0)),  # q
                pl.BlockSpec((block_b, Lk, Dk), lambda b, l: (b, 0, 0)),        # k
                pl.BlockSpec((block_b, Lk, Dv), lambda b, l: (b, 0, 0)),        # v
            ],
            out_specs=[
                pl.BlockSpec((block_b, block_lq, Dv), lambda b, l: (b, l, 0)),  # output
                pl.BlockSpec((block_b, block_lq, Lk), lambda b, l: (b, l, 0)),  # attn
            ],
        ),
        compiler_params=pltpu.CompilerParams(
            dimension_semantics=("parallel", "parallel"),
            vmem_limit_bytes=vmem_limit,
        ),
    )(q, k, v)
    return out, attn


# ----------------------------------------------------------------------------
# Demo / correctness check
# ----------------------------------------------------------------------------
if __name__ == "__main__":
    # Shapes consistent with how the module is used: q/k/v are
    # (n_head * batch, seq, d_per_head) tensors, e.g. n_head=4, batch=2 -> B=8.
    B, Lq, Lk, Dk, Dv = 8, 8, 8, 16, 16
    temperature = float(Dk) ** 0.5

    key = jax.random.PRNGKey(0)
    kq, kk, kv = jax.random.split(key, 3)
    q = jax.random.normal(kq, (B, Lq, Dk), jnp.float32)
    k = jax.random.normal(kk, (B, Lk, Dk), jnp.float32)
    v = jax.random.normal(kv, (B, Lk, Dv), jnp.float32)

    out, attn = scaled_dot_product_attention(q, k, v, temperature)
    jax.block_until_ready((out, attn))

    assert out.shape == (B, Lq, Dv)
    assert attn.shape == (B, Lq, Lk)

    # Pure-JAX reference (same math as the torch module with mask=None, eval).
    ref_attn = jax.nn.softmax(
        jnp.einsum("bqd,bkd->bqk", q, k,
                   precision=jax.lax.Precision.HIGHEST) / temperature, axis=-1)
    ref_out = jnp.einsum("bqk,bkd->bqd", ref_attn, v,
                         precision=jax.lax.Precision.HIGHEST)

    assert bool(jnp.allclose(attn, ref_attn, atol=2e-3, rtol=2e-3))
    assert bool(jnp.allclose(out, ref_out, atol=2e-3, rtol=2e-3))
    # Exact reciprocal in the kernel -> rows sum to 1 to f32 precision.
    assert bool(jnp.allclose(jnp.sum(attn, axis=-1), 1.0, atol=1e-4))

    print("KERNEL_OK")
</pallas_src>

<mosaic_0001>
module attributes {stable_mosaic.version = 11 : i64} {
  func.func @sdpa_kernel(%arg0: i32, %arg1: i32, %arg2: memref<4x8x16xf32, #tpu.memory_space<vmem>>, %arg3: memref<4x8x16xf32, #tpu.memory_space<vmem>>, %arg4: memref<4x8x16xf32, #tpu.memory_space<vmem>>, %arg5: memref<4x8x16xf32, #tpu.memory_space<vmem>>, %arg6: memref<4x8x8xf32, #tpu.memory_space<vmem>>) attributes {dimension_semantics = [#tpu.dimension_semantics<parallel>, #tpu.dimension_semantics<parallel>], iteration_bounds = array<i64: 2, 1>, scalar_prefetch = 0 : i64, scratch_operands = 0 : i64, tpu.core_type = #tpu.core_type<tc>, window_params = [{transform_indices = @transform_0, window_bounds = array<i64: 4, 8, 16>}, {transform_indices = @transform_1, window_bounds = array<i64: 4, 8, 16>}, {transform_indices = @transform_2, window_bounds = array<i64: 4, 8, 16>}, {transform_indices = @transform_3, window_bounds = array<i64: 4, 8, 16>}, {transform_indices = @transform_4, window_bounds = array<i64: 4, 8, 8>}]} {
    %c0 = arith.constant 0 : index
    %c0_0 = arith.constant 0 : index
    %c0_1 = arith.constant 0 : index
    %0 = vector.load %arg2[%c0, %c0_0, %c0_1] : memref<4x8x16xf32, #tpu.memory_space<vmem>>, vector<4x8x16xf32>
    %cst = arith.constant 2.500000e-01 : f32
    %1 = vector.broadcast %cst : f32 to vector<4x8x16xf32>
    %2 = arith.mulf %0, %1 : vector<4x8x16xf32>
    %c0_2 = arith.constant 0 : index
    %c0_3 = arith.constant 0 : index
    %c0_4 = arith.constant 0 : index
    %3 = vector.load %arg3[%c0_2, %c0_3, %c0_4] : memref<4x8x16xf32, #tpu.memory_space<vmem>>, vector<4x8x16xf32>
    %cst_5 = arith.constant dense<0.000000e+00> : vector<4x8x8xf32>
    %4 = tpu.matmul %2, %3, %cst_5 {dimension_numbers = #tpu.dot_dimension_numbers<[2], [2], [1], [1], [0, 0, 0, 1, 1, 1], [0], [0]>} : vector<4x8x16xf32>, vector<4x8x16xf32>, vector<4x8x8xf32> -> vector<4x8x8xf32>
    %cst_6 = arith.constant dense<0xFF800000> : vector<4x8xf32>
    %5 = vector.multi_reduction <maximumf>, %4, %cst_6 [2] : vector<4x8x8xf32> to vector<4x8xf32>
    %6 = vector.shape_cast %5 : vector<4x8xf32> to vector<4x8x1xf32>
    %7 = vector.broadcast %6 : vector<4x8x1xf32> to vector<4x8x8xf32>
    %8 = arith.subf %4, %7 : vector<4x8x8xf32>
    %9 = math.exp %8 : vector<4x8x8xf32>
    %cst_7 = arith.constant dense<0.000000e+00> : vector<4x8xf32>
    %10 = vector.multi_reduction <add>, %9, %cst_7 [2] : vector<4x8x8xf32> to vector<4x8xf32>
    %11 = vector.shape_cast %10 : vector<4x8xf32> to vector<4x8x1xf32>
    %cst_8 = arith.constant 1.000000e+00 : f32
    %12 = vector.broadcast %cst_8 : f32 to vector<4x8x1xf32>
    %13 = arith.divf %12, %11 : vector<4x8x1xf32>
    %14 = vector.broadcast %13 : vector<4x8x1xf32> to vector<4x8x8xf32>
    %15 = arith.mulf %9, %14 : vector<4x8x8xf32>
    %c0_9 = arith.constant 0 : index
    %c0_10 = arith.constant 0 : index
    %c0_11 = arith.constant 0 : index
    %16 = vector.load %arg6[%c0_9, %c0_10, %c0_11] : memref<4x8x8xf32, #tpu.memory_space<vmem>>, vector<4x8x8xf32>
    tpu.vector_store %arg6[%c0_9, %c0_10, %c0_11], %15 {strides = array<i32>} : memref<4x8x8xf32, #tpu.memory_space<vmem>>, vector<4x8x8xf32>,
    %c0_12 = arith.constant 0 : index
    %c0_13 = arith.constant 0 : index
    %c0_14 = arith.constant 0 : index
    %17 = vector.load %arg4[%c0_12, %c0_13, %c0_14] : memref<4x8x16xf32, #tpu.memory_space<vmem>>, vector<4x8x16xf32>
    %cst_15 = arith.constant dense<0.000000e+00> : vector<4x8x16xf32>
    %18 = tpu.matmul %15, %17, %cst_15 {dimension_numbers = #tpu.dot_dimension_numbers<[2], [1], [1], [2], [0, 0, 0, 1, 1, 2], [0], [0]>} : vector<4x8x8xf32>, vector<4x8x16xf32>, vector<4x8x16xf32> -> vector<4x8x16xf32>
    %c0_16 = arith.constant 0 : index
    %c0_17 = arith.constant 0 : index
    %c0_18 = arith.constant 0 : index
    %19 = vector.load %arg5[%c0_16, %c0_17, %c0_18] : memref<4x8x16xf32, #tpu.memory_space<vmem>>, vector<4x8x16xf32>
    tpu.vector_store %arg5[%c0_16, %c0_17, %c0_18], %18 {strides = array<i32>} : memref<4x8x16xf32, #tpu.memory_space<vmem>>, vector<4x8x16xf32>,
    return
  }
  func.func @transform_0(%arg0: i32, %arg1: i32) -> (i32, i32, i32) {
    %c0_i32 = arith.constant 0 : i32
    %c0_i32_0 = arith.constant 0 : i32
    return %arg0, %arg1, %c0_i32 : i32, i32, i32
  }
  func.func @transform_1(%arg0: i32, %arg1: i32) -> (i32, i32, i32) {
    %c0_i32 = arith.constant 0 : i32
    %c0_i32_0 = arith.constant 0 : i32
    %c0_i32_1 = arith.constant 0 : i32
    return %arg0, %c0_i32, %c0_i32_0 : i32, i32, i32
  }
  func.func @transform_2(%arg0: i32, %arg1: i32) -> (i32, i32, i32) {
    %c0_i32 = arith.constant 0 : i32
    %c0_i32_0 = arith.constant 0 : i32
    %c0_i32_1 = arith.constant 0 : i32
    return %arg0, %c0_i32, %c0_i32_0 : i32, i32, i32
  }
  func.func @transform_3(%arg0: i32, %arg1: i32) -> (i32, i32, i32) {
    %c0_i32 = arith.constant 0 : i32
    %c0_i32_0 = arith.constant 0 : i32
    return %arg0, %arg1, %c0_i32 : i32, i32, i32
  }
  func.func @transform_4(%arg0: i32, %arg1: i32) -> (i32, i32, i32) {
    %c0_i32 = arith.constant 0 : i32
    %c0_i32_0 = arith.constant 0 : i32
    return %arg0, %arg1, %c0_i32 : i32, i32, i32
  }
}

</mosaic_0001>

<llo_original>
// kernel: tpu_custom_call.1
$region0: #{tpu_custom_call.1}
  #allocation0 [shape = 'u32[]', space=smem, size = 0x4, offset = 0x4, fixed_abs, tag = 'smem constant byte address 0x4 - core index']
  #allocation1 [shape = 'u32[72,128]{1,0:T(1,128)}', space=vmem, size = 0x9000, scoped, tag = 'internal scratch']
  %s0 = inlined_call_operand.hbm [shape: f32[8,8,16], index: 0, kind: input, shape index: {}]
  %s1 = inlined_call_operand.hbm [shape: f32[8,8,16], index: 1, kind: input, shape index: {}]
  %s2 = inlined_call_operand.hbm [shape: f32[8,8,16], index: 2, kind: input, shape index: {}]
  %s3 = inlined_call_operand.hbm [shape: f32[8,8,16], index: 3, kind: output, shape index: {0}]
  %s4 = inlined_call_operand.hbm [shape: f32[8,8,8], index: 4, kind: output, shape index: {1}]
  %5 = xla_tuple %s3, %s4
  %s6 = sld [smem:[#allocation0]]
  $region65: #{tpu_custom_call.1} parent=0
    _
  %s8 = ssub.s32 1, %s6
  %s9 = scalar_select 0, %s8, %s6
  $region1: #{tpu_custom_call.1} parent=0
    #allocation2 [shape = 'u8[32768]{0}', space=vmem, size = 0x8000, scoped, tag = 'input window, operand 0']
    #allocation3 [shape = 's32[2]{0}', space=sflag, size = 0x8, scoped, tag = 'scoped memory for tpu_custom_call.1']
    #allocation4 [shape = 's32[2]{0}', space=sflag, size = 0x8, scoped, tag = 'scoped memory for tpu_custom_call.1']
    #allocation5 [shape = 'u8[32768]{0}', space=vmem, size = 0x8000, scoped, tag = 'input window, operand 1']
    #allocation6 [shape = 's32[2]{0}', space=sflag, size = 0x8, scoped, tag = 'scoped memory for tpu_custom_call.1']
    #allocation7 [shape = 'u8[32768]{0}', space=vmem, size = 0x8000, scoped, tag = 'input window, operand 2']
    #allocation8 [shape = 'u8[32768]{0}', space=vmem, size = 0x8000, scoped, tag = 'output window, operand 0']
    #allocation9 [shape = 'u8[32768]{0}', space=vmem, size = 0x8000, scoped, tag = 'output window, operand 1']
    #allocation10 [shape = 's32[2]{0}', space=sflag, size = 0x8, scoped, tag = 'scoped memory for tpu_custom_call.1']
    %10 = vsyncpa [#allocation3], 0
    %s11 = scalar_lea.sflag [#allocation3], 1
    %12 = vsyncpa %s11, 0
    %13 = vsyncpa [#allocation6], 0
    %s14 = scalar_lea.sflag [#allocation6], 1
    %15 = vsyncpa %s14, 0
    %16 = vsyncpa [#allocation4], 0
    %s17 = scalar_lea.sflag [#allocation4], 1
    %18 = vsyncpa %s17, 0
    %19 = vsyncpa [#allocation10], 0
    %s20 = scalar_lea.sflag [#allocation10], 1
    %21 = vsyncpa %s20, 0
    loop: start=0, step=1, limit=4
    $region2: #{tpu_custom_call.1} parent=1 // loop_pre_header
      _
    $region3: #{tpu_custom_call.1} parent=1 // loop_header
      %s23 = sphi 0, %s27
      %p24 = scmp.ge.s32.totalorder %s23, 4
      %s30 = sphi 0, %s42
      %s31 = sphi 0, %s38
      %s32 = sphi 0, %s30
      %s33 = sphi 0, %s31
      %s34 = sphi 0, %s32
      %s35 = sphi 0, %s33
      %s47 = sphi 0, %s49
      %s50 = sphi 0, %s47
      %s51 = sphi 0, %s50
      %s67 = sphi 0, %s51
      %s73 = sphi 0, %s75
      %s76 = sphi 0, %s73
      %s77 = sphi 0, %s76
      %s93 = sphi 0, %s77
      %s99 = sphi 0, %s101
      %s102 = sphi 0, %s99
      %s103 = sphi 0, %s102
      %s119 = sphi 0, %s103
      %s127 = sphi 0, %s129
      %s130 = sphi 0, %s127
      %s131 = sphi 0, %s130
      %s147 = sphi 0, %s131
      %s155 = sphi 0, %s157
      %s158 = sphi 0, %s155
      %s159 = sphi 0, %s158
      %s175 = sphi 0, %s159
    $region4: #{tpu_custom_call.1} parent=1 // loop_header_branch
      %26 = sbr.rel (%p24) target = $region8
    $region5: #{tpu_custom_call.1} parent=1 // loop_body
      %s28 = ssub.s32 %s23, 1
      %s29 = ssub.s32 %s23, 2
      %s36 = sadd.s32 1, %s31
      %p37 = scmp.ge.s32.totalorder %s36, 1
      %s38 = scalar_select %p37, 0, %s36
      %s39 = sadd.s32 1, %s30
      %s40 = scalar_select %p37, %s39, %s30
      %p41 = scmp.ge.s32.totalorder %s40, 2
      %s42 = scalar_select %p41, 0, %s40
      %s43 = ssub.s32 %s30, %s42
      %s44 = ssub.s32 %s31, %s38
      %s45 = sor.u32 %s43, %s44
      %p46 = scmp.eq.s32.totalorder %s45, 0
      %s48 = sadd.s32 %s47, 1
      %s49 = scalar_select %p46, %s47, %s48
      %p52 = pneg %p46
      %p53 = scmp.eq.s32.totalorder %s23, 1
      %p54 = por %p52, %p53
      %p55 = scmp.ne.s32.totalorder %s47, %s50
      %p56 = scmp.eq.s32.totalorder %s23, 0
      %p57 = por %p55, %p56
      %p58 = scmp.ne.s32.totalorder %s47, %s50
      %p59 = scmp.eq.s32.totalorder %s28, 1
      %p60 = por %p58, %p59
      %p61 = scmp.ne.s32.totalorder %s50, %s51
      %p62 = scmp.eq.s32.totalorder %s28, 0
      %p63 = por %p61, %p62
      %p64 = scmp.ne.s32.totalorder %s50, %s51
      %p65 = scmp.eq.s32.totalorder %s29, 1
      %p66 = por %p64, %p65
      %p68 = scmp.ne.s32.totalorder %s51, %s67
      %p69 = scmp.eq.s32.totalorder %s29, 0
      %p70 = por %p68, %p69
      %s71 = ssub.s32 %s30, %s42
      %p72 = scmp.eq.s32.totalorder %s71, 0
      %s74 = sadd.s32 %s73, 1
      %s75 = scalar_select %p72, %s73, %s74
      %p78 = pneg %p72
      %p79 = scmp.eq.s32.totalorder %s23, 1
      %p80 = por %p78, %p79
      %p81 = scmp.ne.s32.totalorder %s73, %s76
      %p82 = scmp.eq.s32.totalorder %s23, 0
      %p83 = por %p81, %p82
      %p84 = scmp.ne.s32.totalorder %s73, %s76
      %p85 = scmp.eq.s32.totalorder %s28, 1
      %p86 = por %p84, %p85
      %p87 = scmp.ne.s32.totalorder %s76, %s77
      %p88 = scmp.eq.s32.totalorder %s28, 0
      %p89 = por %p87, %p88
      %p90 = scmp.ne.s32.totalorder %s76, %s77
      %p91 = scmp.eq.s32.totalorder %s29, 1
      %p92 = por %p90, %p91
      %p94 = scmp.ne.s32.totalorder %s77, %s93
      %p95 = scmp.eq.s32.totalorder %s29, 0
      %p96 = por %p94, %p95
      %s97 = ssub.s32 %s30, %s42
      %p98 = scmp.eq.s32.totalorder %s97, 0
      %s100 = sadd.s32 %s99, 1
      %s101 = scalar_select %p98, %s99, %s100
      %p104 = pneg %p98
      %p105 = scmp.eq.s32.totalorder %s23, 1
      %p106 = por %p104, %p105
      %p107 = scmp.ne.s32.totalorder %s99, %s102
      %p108 = scmp.eq.s32.totalorder %s23, 0
      %p109 = por %p107, %p108
      %p110 = scmp.ne.s32.totalorder %s99, %s102
      %p111 = scmp.eq.s32.totalorder %s28, 1
      %p112 = por %p110, %p111
      %p113 = scmp.ne.s32.totalorder %s102, %s103
      %p114 = scmp.eq.s32.totalorder %s28, 0
      %p115 = por %p113, %p114
      %p116 = scmp.ne.s32.totalorder %s102, %s103
      %p117 = scmp.eq.s32.totalorder %s29, 1
      %p118 = por %p116, %p117
      %p120 = scmp.ne.s32.totalorder %s103, %s119
      %p121 = scmp.eq.s32.totalorder %s29, 0
      %p122 = por %p120, %p121
      %s123 = ssub.s32 %s30, %s42
      %s124 = ssub.s32 %s31, %s38
      %s125 = sor.u32 %s123, %s124
      %p126 = scmp.eq.s32.totalorder %s125, 0
      %s128 = sadd.s32 %s127, 1
      %s129 = scalar_select %p126, %s127, %s128
      %p132 = pneg %p126
      %p133 = scmp.eq.s32.totalorder %s23, 1
      %p134 = por %p132, %p133
      %p135 = scmp.ne.s32.totalorder %s127, %s130
      %p136 = scmp.eq.s32.totalorder %s23, 0
      %p137 = por %p135, %p136
      %p138 = scmp.ne.s32.totalorder %s127, %s130
      %p139 = scmp.eq.s32.totalorder %s28, 1
      %p140 = por %p138, %p139
      %p141 = scmp.ne.s32.totalorder %s130, %s131
      %p142 = scmp.eq.s32.totalorder %s28, 0
      %p143 = por %p141, %p142
      %p144 = scmp.ne.s32.totalorder %s130, %s131
      %p145 = scmp.eq.s32.totalorder %s29, 1
      %p146 = por %p144, %p145
      %p148 = scmp.ne.s32.totalorder %s131, %s147
      %p149 = scmp.eq.s32.totalorder %s29, 0
      %p150 = por %p148, %p149
      %s151 = ssub.s32 %s30, %s42
      %s152 = ssub.s32 %s31, %s38
      %s153 = sor.u32 %s151, %s152
      %p154 = scmp.eq.s32.totalorder %s153, 0
      %s156 = sadd.s32 %s155, 1
      %s157 = scalar_select %p154, %s155, %s156
      %p160 = pneg %p154
      %p161 = scmp.eq.s32.totalorder %s23, 1
      %p162 = por %p160, %p161
      %p163 = scmp.ne.s32.totalorder %s155, %s158
      %p164 = scmp.eq.s32.totalorder %s23, 0
      %p165 = por %p163, %p164
      %p166 = scmp.ne.s32.totalorder %s155, %s158
      %p167 = scmp.eq.s32.totalorder %s28, 1
      %p168 = por %p166, %p167
      %p169 = scmp.ne.s32.totalorder %s158, %s159
      %p170 = scmp.eq.s32.totalorder %s28, 0
      %p171 = por %p169, %p170
      %p172 = scmp.ne.s32.totalorder %s158, %s159
      %p173 = scmp.eq.s32.totalorder %s29, 1
      %p174 = por %p172, %p173
      %p176 = scmp.ne.s32.totalorder %s159, %s175
      %p177 = scmp.eq.s32.totalorder %s29, 0
      %p178 = por %p176, %p177
      %p179 = scmp.le.s32.totalorder 1, %s23
      %p180 = scmp.lt.s32.totalorder %s23, 3
      %p181 = pnand %p179, %p180
      %p182 = pneg %p181
      // Predicated region
      $region9: #{tpu_custom_call.1} parent=5 // pred_check
        _
      $region10: #{tpu_custom_call.1} parent=5 // pred_check_branch
        %184 = sbr.rel (%p181) target = $region12
      $region11: #{tpu_custom_call.1} parent=5 // pred_region
        %s185 = ssub.s32 %s23, 1
      $region12: #{tpu_custom_call.1} parent=5 // pred_fallthru
        _
      %p186 = scmp.lt.s32.totalorder %s23, 2
      // Predicated region
      $region13: #{tpu_custom_call.1} parent=5 // pred_check
        %p187 = pneg %p186
      $region14: #{tpu_custom_call.1} parent=5 // pred_check_branch
        %189 = sbr.rel (%p187) target = $region16
      $region15: #{tpu_custom_call.1} parent=5 // pred_region
        // Predicated region
        $region17: #{tpu_custom_call.1} parent=15 // pred_check
          %p190 = pneg %p57
        $region18: #{tpu_custom_call.1} parent=15 // pred_check_branch
          %192 = sbr.rel (%p190) target = $region20
        $region19: #{tpu_custom_call.1} parent=15 // pred_region
          %s193 = sand.u32 %s47, 1
          %s194 = scalar_lea.sflag [#allocation3], %s193
          %s195 = sand.u32 %s47, 1
          %s196 = smul.addr %s195, 32
          %s197 = scalar_lea.vmem [#allocation2], %s196
          %s198 = smul.u32 4, %s30
          %200 = vsyncadd %s194, 0
          %s201 = sadd.s32 %s31, %s198
          %s202 = smul.addr %s201, 8
          %s203 = scalar_lea.hbm %s0, %s202
          %s204 = sshll.u32 %s203, 4
          %s205 = int_to_ptr.hbm [resolvable:$true] %s204
          %s206 = sshll.u32 %s197, 4
          %s207 = int_to_ptr.vmem [resolvable:$true] %s206
          %212 = dma.hbm_to_vmem [thread:$0]  %s205, 512, %s207, %s194, 128, 128, 8
        $region20: #{tpu_custom_call.1} parent=15 // pred_fallthru
          _
        // Predicated region
        $region21: #{tpu_custom_call.1} parent=15 // pred_check
          %p213 = pneg %p83
        $region22: #{tpu_custom_call.1} parent=15 // pred_check_branch
          %215 = sbr.rel (%p213) target = $region24
        $region23: #{tpu_custom_call.1} parent=15 // pred_region
          %s216 = sand.u32 %s23, 1
          %s217 = scalar_lea.sflag [#allocation6], %s216
          %s218 = sand.u32 %s73, 1
          %s219 = smul.addr %s218, 32
          %s220 = scalar_lea.vmem [#allocation5], %s219
          %s221 = smul.u32 4, %s30
          %223 = vsyncadd %s217, 0
          %s224 = smul.addr %s221, 8
          %s225 = scalar_lea.hbm %s1, %s224
          %s226 = sshll.u32 %s225, 4
          %s227 = int_to_ptr.hbm [resolvable:$true] %s226
          %s228 = sshll.u32 %s220, 4
          %s229 = int_to_ptr.vmem [resolvable:$true] %s228
          %234 = dma.hbm_to_vmem [thread:$0]  %s227, 512, %s229, %s217, 128, 128, 8
        $region24: #{tpu_custom_call.1} parent=15 // pred_fallthru
          _
        // Predicated region
        $region25: #{tpu_custom_call.1} parent=15 // pred_check
          %p235 = pneg %p109
        $region26: #{tpu_custom_call.1} parent=15 // pred_check_branch
          %237 = sbr.rel (%p235) target = $region28
        $region27: #{tpu_custom_call.1} parent=15 // pred_region
          %s238 = sand.u32 %s23, 1
          %s239 = scalar_lea.sflag [#allocation6], %s238
          %s240 = sand.u32 %s99, 1
          %s241 = smul.addr %s240, 32
          %s242 = scalar_lea.vmem [#allocation7], %s241
          %s243 = smul.u32 4, %s30
          %245 = vsyncadd %s239, 0
          %s246 = smul.addr %s243, 8
          %s247 = scalar_lea.hbm %s2, %s246
          %s248 = sshll.u32 %s247, 4
          %s249 = int_to_ptr.hbm [resolvable:$true] %s248
          %s250 = sshll.u32 %s242, 4
          %s251 = int_to_ptr.vmem [resolvable:$true] %s250
          %256 = dma.hbm_to_vmem [thread:$0]  %s249, 512, %s251, %s239, 128, 128, 8
        $region28: #{tpu_custom_call.1} parent=15 // pred_fallthru
          _
      $region16: #{tpu_custom_call.1} parent=5 // pred_fallthru
        _
      %p257 = scmp.le.s32.totalorder 1, %s23
      %p258 = scmp.lt.s32.totalorder %s23, 3
      %p259 = pnand %p257, %p258
      %p260 = pneg %p259
      // Predicated region
      $region29: #{tpu_custom_call.1} parent=5 // pred_check
        _
      $region30: #{tpu_custom_call.1} parent=5 // pred_check_branch
        %262 = sbr.rel (%p259) target = $region32
      $region31: #{tpu_custom_call.1} parent=5 // pred_region
        %s263 = ssub.s32 %s23, 1
        %s264 = sand.u32 %s50, 1
        %s265 = scalar_lea.sflag [#allocation3], %s264
        %s266 = sand.u32 %s50, 1
        %s267 = smul.addr %s266, 32
        %s268 = scalar_lea.vmem [#allocation2], %s267
        // Predicated region
        $region33: #{tpu_custom_call.1} parent=31 // pred_check
          %p269 = pneg %p63
        $region34: #{tpu_custom_call.1} parent=31 // pred_check_branch
          %271 = sbr.rel (%p269) target = $region36
        $region35: #{tpu_custom_call.1} parent=31 // pred_region
          %273 = dma.done %s265, 512
        $region36: #{tpu_custom_call.1} parent=31 // pred_fallthru
          _
        %s274 = sand.u32 %s28, 1
        %s275 = scalar_lea.sflag [#allocation6], %s274
        %s276 = sand.u32 %s76, 1
        %s277 = smul.addr %s276, 32
        %s278 = scalar_lea.vmem [#allocation5], %s277
        // Predicated region
        $region37: #{tpu_custom_call.1} parent=31 // pred_check
          %p279 = pneg %p89
        $region38: #{tpu_custom_call.1} parent=31 // pred_check_branch
          %281 = sbr.rel (%p279) target = $region40
        $region39: #{tpu_custom_call.1} parent=31 // pred_region
          %283 = dma.done %s275, 512
        $region40: #{tpu_custom_call.1} parent=31 // pred_fallthru
          _
        %s284 = sand.u32 %s28, 1
        %s285 = scalar_lea.sflag [#allocation6], %s284
        %s286 = sand.u32 %s102, 1
        %s287 = smul.addr %s286, 32
        %s288 = scalar_lea.vmem [#allocation7], %s287
        // Predicated region
        $region41: #{tpu_custom_call.1} parent=31 // pred_check
          %p289 = pneg %p115
        $region42: #{tpu_custom_call.1} parent=31 // pred_check_branch
          %291 = sbr.rel (%p289) target = $region44
        $region43: #{tpu_custom_call.1} parent=31 // pred_region
          %293 = dma.done %s285, 512
        $region44: #{tpu_custom_call.1} parent=31 // pred_fallthru
          _
        %s294 = sand.u32 %s50, 1
        %s295 = scalar_lea.sflag [#allocation3], %s294
        %s296 = sand.u32 %s50, 1
        %s297 = smul.addr %s296, 32
        %s298 = scalar_lea.vmem [#allocation2], %s297
        %p299 = pneg %p63
        %p300 = pneg %p60
        %s301 = sand.u32 %s28, 1
        %s302 = scalar_lea.sflag [#allocation6], %s301
        %s303 = sand.u32 %s76, 1
        %s304 = smul.addr %s303, 32
        %s305 = scalar_lea.vmem [#allocation5], %s304
        %p306 = pneg %p89
        %p307 = pneg %p86
        %s308 = sand.u32 %s28, 1
        %s309 = scalar_lea.sflag [#allocation6], %s308
        %s310 = sand.u32 %s102, 1
        %s311 = smul.addr %s310, 32
        %s312 = scalar_lea.vmem [#allocation7], %s311
        %p313 = pneg %p115
        %p314 = pneg %p112
        %p315 = pneg %p143
        %p316 = pneg %p140
        %s317 = sand.u32 %s130, 1
        %s318 = scalar_lea.sflag [#allocation4], %s317
        %s319 = sand.u32 %s130, 1
        %s320 = smul.addr %s319, 32
        %s321 = scalar_lea.vmem [#allocation8], %s320
        %p322 = pneg %p171
        %p323 = pneg %p168
        %s324 = sand.u32 %s158, 1
        %s325 = scalar_lea.sflag [#allocation10], %s324
        %s326 = sand.u32 %s158, 1
        %s327 = smul.addr %s326, 32
        %s328 = scalar_lea.vmem [#allocation9], %s327
        %s329 = smul.u32 4, %s32
        %s330 = smul.u32 4, %s32
        %s331 = smul.u32 4, %s32
        %s332 = smul.u32 4, %s32
        %s333 = smul.u32 4, %s32
        %v334 = vld [vmem:[%s268] sm:$0xff]
        %v335 = vld [vmem:[%s268 + $0x8] sm:$0xff]
        %v336 = vld [vmem:[%s268 + $0x10] sm:$0xff]
        %v337 = vld [vmem:[%s268 + $0x18] sm:$0xff]
        %v338 = vmul.f32 %v334, 0.25
        %v339 = vmul.f32 %v335, 0.25
        %v340 = vmul.f32 %v336, 0.25
        %v341 = vmul.f32 %v337, 0.25
        %v342 = vld [vmem:[%s278] sm:$0xff]
        %v343 = vld [vmem:[%s278 + $0x8] sm:$0xff]
        %v344 = vld [vmem:[%s278 + $0x10] sm:$0xff]
        %v345 = vld [vmem:[%s278 + $0x18] sm:$0xff]
        %vm346 = vcmask 130048
        %v348 = vsel %vm346, %v338, 0
        %v351 = vsel %vm346, %v342, 0
        %353 = vmatpush.xpose.msra.mxu0 0.0
        %354 = vmatpush.xpose.msra.mxu0 0.0
        %355 = vmatpush.xpose.msra.mxu0 0.0
        %356 = vmatpush.xpose.msra.mxu0 0.0
        %357 = vmatpush.xpose.msra.mxu0 0.0
        %358 = vmatpush.xpose.msra.mxu0 0.0
        %359 = vmatpush.xpose.msra.mxu0 0.0
        %360 = vmatpush.xpose.msra.mxu0 0.0
        %361 = vmatpush.xpose.msra.mxu0 0.0
        %362 = vmatpush.xpose.msra.mxu0 0.0
        %363 = vmatpush.xpose.msra.mxu0 0.0
        %364 = vmatpush.xpose.msra.mxu0 0.0
        %365 = vmatpush.xpose.msra.mxu0 0.0
        %366 = vmatpush.xpose.msra.mxu0 0.0
        %367 = vmatpush.xpose.msra.mxu0 0.0
        %368 = vmatpush.xpose.msra.mxu0 %v351
        %369 = vmatmul.f32.gmra.mxu0 %v348
        %v370 = vpop.f32.mrf.mxu0
        %v371 = vadd.f32 0.0, %v370
        %372 = vdwg.mxu0
        %v374 = vsel %vm346, %v339, 0
        %v377 = vsel %vm346, %v343, 0
        %379 = vmatpush.xpose.msra.mxu0 0.0
        %380 = vmatpush.xpose.msra.mxu0 0.0
        %381 = vmatpush.xpose.msra.mxu0 0.0
        %382 = vmatpush.xpose.msra.mxu0 0.0
        %383 = vmatpush.xpose.msra.mxu0 0.0
        %384 = vmatpush.xpose.msra.mxu0 0.0
        %385 = vmatpush.xpose.msra.mxu0 0.0
        %386 = vmatpush.xpose.msra.mxu0 0.0
        %387 = vmatpush.xpose.msra.mxu0 0.0
        %388 = vmatpush.xpose.msra.mxu0 0.0
        %389 = vmatpush.xpose.msra.mxu0 0.0
        %390 = vmatpush.xpose.msra.mxu0 0.0
        %391 = vmatpush.xpose.msra.mxu0 0.0
        %392 = vmatpush.xpose.msra.mxu0 0.0
        %393 = vmatpush.xpose.msra.mxu0 0.0
        %394 = vmatpush.xpose.msra.mxu0 %v377
        %395 = vmatmul.f32.gmra.mxu0 %v374
        %v396 = vpop.f32.mrf.mxu0
        %v397 = vadd.f32 0.0, %v396
        %398 = vdwg.mxu0
        %v400 = vsel %vm346, %v340, 0
        %v403 = vsel %vm346, %v344, 0
        %405 = vmatpush.xpose.msra.mxu0 0.0
        %406 = vmatpush.xpose.msra.mxu0 0.0
        %407 = vmatpush.xpose.msra.mxu0 0.0
        %408 = vmatpush.xpose.msra.mxu0 0.0
        %409 = vmatpush.xpose.msra.mxu0 0.0
        %410 = vmatpush.xpose.msra.mxu0 0.0
        %411 = vmatpush.xpose.msra.mxu0 0.0
        %412 = vmatpush.xpose.msra.mxu0 0.0
        %413 = vmatpush.xpose.msra.mxu0 0.0
        %414 = vmatpush.xpose.msra.mxu0 0.0
        %415 = vmatpush.xpose.msra.mxu0 0.0
        %416 = vmatpush.xpose.msra.mxu0 0.0
        %417 = vmatpush.xpose.msra.mxu0 0.0
        %418 = vmatpush.xpose.msra.mxu0 0.0
        %419 = vmatpush.xpose.msra.mxu0 0.0
        %420 = vmatpush.xpose.msra.mxu0 %v403
        %421 = vmatmul.f32.gmra.mxu0 %v400
        %v422 = vpop.f32.mrf.mxu0
        %v423 = vadd.f32 0.0, %v422
        %424 = vdwg.mxu0
        %v426 = vsel %vm346, %v341, 0
        %v429 = vsel %vm346, %v345, 0
        %431 = vmatpush.xpose.msra.mxu0 0.0
        %432 = vmatpush.xpose.msra.mxu0 0.0
        %433 = vmatpush.xpose.msra.mxu0 0.0
        %434 = vmatpush.xpose.msra.mxu0 0.0
        %435 = vmatpush.xpose.msra.mxu0 0.0
        %436 = vmatpush.xpose.msra.mxu0 0.0
        %437 = vmatpush.xpose.msra.mxu0 0.0
        %438 = vmatpush.xpose.msra.mxu0 0.0
        %439 = vmatpush.xpose.msra.mxu0 0.0
        %440 = vmatpush.xpose.msra.mxu0 0.0
        %441 = vmatpush.xpose.msra.mxu0 0.0
        %442 = vmatpush.xpose.msra.mxu0 0.0
        %443 = vmatpush.xpose.msra.mxu0 0.0
        %444 = vmatpush.xpose.msra.mxu0 0.0
        %445 = vmatpush.xpose.msra.mxu0 0.0
        %446 = vmatpush.xpose.msra.mxu0 %v429
        %447 = vmatmul.f32.gmra.mxu0 %v426
        %v448 = vpop.f32.mrf.mxu0
        %v449 = vadd.f32 0.0, %v448
        %450 = vdwg.mxu0
        %vm451 = vcmask 64512
        %v452 = vsel %vm451, %v371, -inf
        %453 = vmax.xlane.f32.xlu0 %v452
        %v454 = vpop.xlane.xlu0 %453
        %v455 = vsel %vm451, %v397, -inf
        %456 = vmax.xlane.f32.xlu0 %v455
        %v457 = vpop.xlane.xlu0 %456
        %v458 = vsel %vm451, %v423, -inf
        %459 = vmax.xlane.f32.xlu0 %v458
        %v460 = vpop.xlane.xlu0 %459
        %v461 = vsel %vm451, %v449, -inf
        %462 = vmax.xlane.f32.xlu0 %v461
        %v463 = vpop.xlane.xlu0 %462
        %v464 = vsub.f32 %v371, %v454
        %v465 = vsub.f32 %v397, %v457
        %v466 = vsub.f32 %v423, %v460
        %v467 = vsub.f32 %v449, %v463
        %v468 = vmul.f32 %v464, 1.442695
        %v469 = vpow.pop %v468
        %v470 = vmul.f32 %v465, 1.442695
        %v471 = vpow.pop %v470
        %v472 = vmul.f32 %v466, 1.442695
        %v473 = vpow.pop %v472
        %v474 = vmul.f32 %v467, 1.442695
        %v475 = vpow.pop %v474
        %v476 = vsel %vm451, %v469, 0.0
        %477 = vadd.xlane.f32.xlu0 %v476
        %v478 = vpop.xlane.xlu0 %477
        %v479 = vsel %vm451, %v471, 0.0
        %480 = vadd.xlane.f32.xlu0 %v479
        %v481 = vpop.xlane.xlu0 %480
        %v482 = vsel %vm451, %v473, 0.0
        %483 = vadd.xlane.f32.xlu0 %v482
        %v484 = vpop.xlane.xlu0 %483
        %v485 = vsel %vm451, %v475, 0.0
        %486 = vadd.xlane.f32.xlu0 %v485
        %v487 = vpop.xlane.xlu0 %486
        %v488 = vrcp.pop %v478
        %v489 = vmul.f32 %v478, %v488
        %v490 = vsub.f32 1.0, %v489
        %v491 = vmul.f32 %v488, %v490
        %v492 = vadd.f32 %v488, %v491
        %vm493 = vweird.f32 %v478
        %vm494 = vweird.f32 %v488
        %vm495 = vmor %vm493, %vm494
        %v496 = vsel %vm495, %v488, %v492
        %v497 = vand.u32 2147483647, %v478
        %vm498 = vcmp.eq.f32.partialorder %v497, 8.507059e+37
        %v499 = vand.u32 %v478, 2147483648
        %v500 = vor.u32 1.1754944e-38, %v499
        %v501 = vsel %vm498, %v500, %v496
        %v502 = vmul.f32 1.0, %v501
        %v503 = vrcp.pop %v481
        %v504 = vmul.f32 %v481, %v503
        %v505 = vsub.f32 1.0, %v504
        %v506 = vmul.f32 %v503, %v505
        %v507 = vadd.f32 %v503, %v506
        %vm508 = vweird.f32 %v481
        %vm509 = vweird.f32 %v503
        %vm510 = vmor %vm508, %vm509
        %v511 = vsel %vm510, %v503, %v507
        %v512 = vand.u32 2147483647, %v481
        %vm513 = vcmp.eq.f32.partialorder %v512, 8.507059e+37
        %v514 = vand.u32 %v481, 2147483648
        %v515 = vor.u32 1.1754944e-38, %v514
        %v516 = vsel %vm513, %v515, %v511
        %v517 = vmul.f32 1.0, %v516
        %v518 = vrcp.pop %v484
        %v519 = vmul.f32 %v484, %v518
        %v520 = vsub.f32 1.0, %v519
        %v521 = vmul.f32 %v518, %v520
        %v522 = vadd.f32 %v518, %v521
        %vm523 = vweird.f32 %v484
        %vm524 = vweird.f32 %v518
        %vm525 = vmor %vm523, %vm524
        %v526 = vsel %vm525, %v518, %v522
        %v527 = vand.u32 2147483647, %v484
        %vm528 = vcmp.eq.f32.partialorder %v527, 8.507059e+37
        %v529 = vand.u32 %v484, 2147483648
        %v530 = vor.u32 1.1754944e-38, %v529
        %v531 = vsel %vm528, %v530, %v526
        %v532 = vmul.f32 1.0, %v531
        %v533 = vrcp.pop %v487
        %v534 = vmul.f32 %v487, %v533
        %v535 = vsub.f32 1.0, %v534
        %v536 = vmul.f32 %v533, %v535
        %v537 = vadd.f32 %v533, %v536
        %vm538 = vweird.f32 %v487
        %vm539 = vweird.f32 %v533
        %vm540 = vmor %vm538, %vm539
        %v541 = vsel %vm540, %v533, %v537
        %v542 = vand.u32 2147483647, %v487
        %vm543 = vcmp.eq.f32.partialorder %v542, 8.507059e+37
        %v544 = vand.u32 %v487, 2147483648
        %v545 = vor.u32 1.1754944e-38, %v544
        %v546 = vsel %vm543, %v545, %v541
        %v547 = vmul.f32 1.0, %v546
        %v548 = vmul.f32 %v469, %v502
        %v549 = vmul.f32 %v471, %v517
        %v550 = vmul.f32 %v473, %v532
        %v551 = vmul.f32 %v475, %v547
        %552 = vst.msk [vmem:[%s328] sm:$0xff] %vm451, %v548
        %553 = vst.msk [vmem:[%s328 + $0x8] sm:$0xff] %vm451, %v549
        %554 = vst.msk [vmem:[%s328 + $0x10] sm:$0xff] %vm451, %v550
        %555 = vst.msk [vmem:[%s328 + $0x18] sm:$0xff] %vm451, %v551
        %v556 = vld [vmem:[%s288] sm:$0xff]
        %v557 = vld [vmem:[%s288 + $0x8] sm:$0xff]
        %v558 = vld [vmem:[%s288 + $0x10] sm:$0xff]
        %v559 = vld [vmem:[%s288 + $0x18] sm:$0xff]
        %v561 = vsel %vm451, %v548, 0
        %563 = vmatpush.msra.mxu0 0.0
        %564 = vmatpush.msra.mxu0 0.0
        %565 = vmatpush.msra.mxu0 0.0
        %566 = vmatpush.msra.mxu0 0.0
        %567 = vmatpush.msra.mxu0 0.0
        %568 = vmatpush.msra.mxu0 0.0
        %569 = vmatpush.msra.mxu0 0.0
        %570 = vmatpush.msra.mxu0 0.0
        %571 = vmatpush.msra.mxu0 0.0
        %572 = vmatpush.msra.mxu0 0.0
        %573 = vmatpush.msra.mxu0 0.0
        %574 = vmatpush.msra.mxu0 0.0
        %575 = vmatpush.msra.mxu0 0.0
        %576 = vmatpush.msra.mxu0 0.0
        %577 = vmatpush.msra.mxu0 0.0
        %578 = vmatpush.msra.mxu0 %v556
        %579 = vmatmul.f32.gmra.mxu0 %v561
        %v580 = vpop.f32.mrf.mxu0
        %v581 = vadd.f32 0.0, %v580
        %582 = vdwg.mxu0
        %v584 = vsel %vm451, %v549, 0
        %586 = vmatpush.msra.mxu0 0.0
        %587 = vmatpush.msra.mxu0 0.0
        %588 = vmatpush.msra.mxu0 0.0
        %589 = vmatpush.msra.mxu0 0.0
        %590 = vmatpush.msra.mxu0 0.0
        %591 = vmatpush.msra.mxu0 0.0
        %592 = vmatpush.msra.mxu0 0.0
        %593 = vmatpush.msra.mxu0 0.0
        %594 = vmatpush.msra.mxu0 0.0
        %595 = vmatpush.msra.mxu0 0.0
        %596 = vmatpush.msra.mxu0 0.0
        %597 = vmatpush.msra.mxu0 0.0
        %598 = vmatpush.msra.mxu0 0.0
        %599 = vmatpush.msra.mxu0 0.0
        %600 = vmatpush.msra.mxu0 0.0
        %601 = vmatpush.msra.mxu0 %v557
        %602 = vmatmul.f32.gmra.mxu0 %v584
        %v603 = vpop.f32.mrf.mxu0
        %v604 = vadd.f32 0.0, %v603
        %605 = vdwg.mxu0
        %v607 = vsel %vm451, %v550, 0
        %609 = vmatpush.msra.mxu0 0.0
        %610 = vmatpush.msra.mxu0 0.0
        %611 = vmatpush.msra.mxu0 0.0
        %612 = vmatpush.msra.mxu0 0.0
        %613 = vmatpush.msra.mxu0 0.0
        %614 = vmatpush.msra.mxu0 0.0
        %615 = vmatpush.msra.mxu0 0.0
        %616 = vmatpush.msra.mxu0 0.0
        %617 = vmatpush.msra.mxu0 0.0
        %618 = vmatpush.msra.mxu0 0.0
        %619 = vmatpush.msra.mxu0 0.0
        %620 = vmatpush.msra.mxu0 0.0
        %621 = vmatpush.msra.mxu0 0.0
        %622 = vmatpush.msra.mxu0 0.0
        %623 = vmatpush.msra.mxu0 0.0
        %624 = vmatpush.msra.mxu0 %v558
        %625 = vmatmul.f32.gmra.mxu0 %v607
        %v626 = vpop.f32.mrf.mxu0
        %v627 = vadd.f32 0.0, %v626
        %628 = vdwg.mxu0
        %v630 = vsel %vm451, %v551, 0
        %632 = vmatpush.msra.mxu0 0.0
        %633 = vmatpush.msra.mxu0 0.0
        %634 = vmatpush.msra.mxu0 0.0
        %635 = vmatpush.msra.mxu0 0.0
        %636 = vmatpush.msra.mxu0 0.0
        %637 = vmatpush.msra.mxu0 0.0
        %638 = vmatpush.msra.mxu0 0.0
        %639 = vmatpush.msra.mxu0 0.0
        %640 = vmatpush.msra.mxu0 0.0
        %641 = vmatpush.msra.mxu0 0.0
        %642 = vmatpush.msra.mxu0 0.0
        %643 = vmatpush.msra.mxu0 0.0
        %644 = vmatpush.msra.mxu0 0.0
        %645 = vmatpush.msra.mxu0 0.0
        %646 = vmatpush.msra.mxu0 0.0
        %647 = vmatpush.msra.mxu0 %v559
        %648 = vmatmul.f32.gmra.mxu0 %v630
        %v649 = vpop.f32.mrf.mxu0
        %v650 = vadd.f32 0.0, %v649
        %651 = vdwg.mxu0
        %652 = vst.msk [vmem:[%s321] sm:$0xff] %vm346, %v581
        %653 = vst.msk [vmem:[%s321 + $0x8] sm:$0xff] %vm346, %v604
        %654 = vst.msk [vmem:[%s321 + $0x10] sm:$0xff] %vm346, %v627
        %655 = vst.msk [vmem:[%s321 + $0x18] sm:$0xff] %vm346, %v650
        %s656 = sand.u32 %s130, 1
        %s657 = scalar_lea.sflag [#allocation4], %s656
        %s658 = sand.u32 %s130, 1
        %s659 = smul.addr %s658, 32
        %s660 = scalar_lea.vmem [#allocation8], %s659
        %s661 = sand.u32 %s158, 1
        %s662 = scalar_lea.sflag [#allocation10], %s661
        %s663 = sand.u32 %s158, 1
        %s664 = smul.addr %s663, 32
        %s665 = scalar_lea.vmem [#allocation9], %s664
        // Predicated region
        $region45: #{tpu_custom_call.1} parent=31 // pred_check
          %p666 = pneg %p140
        $region46: #{tpu_custom_call.1} parent=31 // pred_check_branch
          %668 = sbr.rel (%p666) target = $region48
        $region47: #{tpu_custom_call.1} parent=31 // pred_region
          %s669 = smul.u32 4, %s32
          %671 = vsyncadd %s657, 0
          %s672 = sadd.s32 %s33, %s669
          %s673 = smul.addr %s672, 8
          %s674 = scalar_lea.hbm %s3, %s673
          %s675 = sshll.u32 %s660, 4
          %s676 = int_to_ptr.vmem [resolvable:$true] %s675
          %s677 = sshll.u32 %s674, 4
          %s678 = int_to_ptr.hbm [resolvable:$true] %s677
          %683 = dma.vmem_to_hbm [thread:$0]  %s676, 512, %s678, %s657, 128, 128, 8
        $region48: #{tpu_custom_call.1} parent=31 // pred_fallthru
          _
        // Predicated region
        $region49: #{tpu_custom_call.1} parent=31 // pred_check
          %p684 = pneg %p168
        $region50: #{tpu_custom_call.1} parent=31 // pred_check_branch
          %686 = sbr.rel (%p684) target = $region52
        $region51: #{tpu_custom_call.1} parent=31 // pred_region
          %s687 = smul.u32 4, %s32
          %689 = vsyncadd %s662, 0
          %s690 = sadd.s32 %s33, %s687
          %s691 = smul.addr %s690, 8
          %s692 = scalar_lea.hbm %s4, %s691
          %s693 = sshll.u32 %s665, 4
          %s694 = int_to_ptr.vmem [resolvable:$true] %s693
          %s695 = sshll.u32 %s692, 4
          %s696 = int_to_ptr.hbm [resolvable:$true] %s695
          %701 = dma.vmem_to_hbm [thread:$0]  %s694, 512, %s696, %s662, 128, 128, 8
        $region52: #{tpu_custom_call.1} parent=31 // pred_fallthru
          _
      $region32: #{tpu_custom_call.1} parent=5 // pred_fallthru
        _
      %p702 = scmp.le.s32.totalorder 2, %s23
      // Predicated region
      $region53: #{tpu_custom_call.1} parent=5 // pred_check
        %p703 = pneg %p702
      $region54: #{tpu_custom_call.1} parent=5 // pred_check_branch
        %705 = sbr.rel (%p703) target = $region56
      $region55: #{tpu_custom_call.1} parent=5 // pred_region
        %s706 = ssub.s32 %s23, 2
        // Predicated region
        $region57: #{tpu_custom_call.1} parent=55 // pred_check
          %p707 = pneg %p146
        $region58: #{tpu_custom_call.1} parent=55 // pred_check_branch
          %709 = sbr.rel (%p707) target = $region60
        $region59: #{tpu_custom_call.1} parent=55 // pred_region
          %s710 = sand.u32 %s131, 1
          %s711 = scalar_lea.sflag [#allocation4], %s710
          %s712 = sand.u32 %s131, 1
          %s713 = smul.addr %s712, 32
          %s714 = scalar_lea.vmem [#allocation8], %s713
          %716 = dma.done %s711, 512
        $region60: #{tpu_custom_call.1} parent=55 // pred_fallthru
          _
        // Predicated region
        $region61: #{tpu_custom_call.1} parent=55 // pred_check
          %p717 = pneg %p174
        $region62: #{tpu_custom_call.1} parent=55 // pred_check_branch
          %719 = sbr.rel (%p717) target = $region64
        $region63: #{tpu_custom_call.1} parent=55 // pred_region
          %s720 = sand.u32 %s159, 1
          %s721 = scalar_lea.sflag [#allocation10], %s720
          %s722 = sand.u32 %s159, 1
          %s723 = smul.addr %s722, 32
          %s724 = scalar_lea.vmem [#allocation9], %s723
          %726 = dma.done %s721, 512
        $region64: #{tpu_custom_call.1} parent=55 // pred_fallthru
          _
      $region56: #{tpu_custom_call.1} parent=5 // pred_fallthru
        _
    $region6: #{tpu_custom_call.1} parent=1 // loop_footer
      %s27 = sadd.s32 1, %s23
    $region7: #{tpu_custom_call.1} parent=1 // loop_footer_branch
      %22 = sbr.rel target = $region3
    $region8: #{tpu_custom_call.1} parent=1 // loop_exit
      _
    %727 = vsyncpa [#allocation3], 1
    %s728 = scalar_lea.sflag [#allocation3], 1
    %729 = vsyncpa %s728, 1
    %730 = vsyncpa [#allocation6], 1
    %s731 = scalar_lea.sflag [#allocation6], 1
    %732 = vsyncpa %s731, 1
    %733 = vsyncpa [#allocation4], 1
    %s734 = scalar_lea.sflag [#allocation4], 1
    %735 = vsyncpa %s734, 1
    %736 = vsyncpa [#allocation10], 1
    %s737 = scalar_lea.sflag [#allocation10], 1
    %738 = vsyncpa %s737, 1

</llo_original>
